<compile_context>
chip_gen: v5e
topology: v5e:2x2
jax: 0.10.0
libtpu: 0.0.40
codegen_flags: <defaults>
</compile_context>

<pallas_src>
import functools

import jax
import jax.numpy as jnp
from jax import lax
from jax.experimental import pallas as pl
from jax.experimental.pallas import tpu as pltpu

EPS = 1e-5
_TAPS = tuple((ky - 1, kx - 1) for ky in range(3) for kx in range(3))


def _double_conv_kernel(*refs, N, H, W, Cout, inline_coords):
    if inline_coords:
        x_ref, w1_ref, g1_ref, be1_ref, w2_ref, g2_ref, be2_ref, out_ref = refs
    else:
        (x_ref, hidx_ref, widx_ref, w1_ref, g1_ref, be1_ref,
         w2_ref, g2_ref, be2_ref, out_ref) = refs

    HW = H * W
    L = N * HW

    # ---- per-lane (h, w) coordinates ---------------------------------------
    if inline_coords:
        # H, W powers of two: lane iota + shift/and (no int div, no coord DMAs).
        lane = lax.broadcasted_iota(jnp.int32, (1, L), 1)
        w_idx = lane & (W - 1)
        h_idx = (lane >> (W.bit_length() - 1)) & (H - 1)
    else:
        h_idx = hidx_ref[...]
        w_idx = widx_ref[...]

    # ---- boundary masks: computed once, reused by BOTH convs ---------------
    vh = {-1: h_idx >= 1, 0: None, 1: h_idx < (H - 1)}
    vw = {-1: w_idx >= 1, 0: None, 1: w_idx < (W - 1)}
    masks = {}
    for dy, dx in _TAPS:
        a, b = vh[dy], vw[dx]
        masks[(dy, dx)] = a if b is None else (b if a is None else a & b)

    def shift_tap(a, dy, dx):
        # tap[:, i] = a[:, (i + dy*W + dx) mod L]  ==  jnp.roll(a, -(dy*W + dx)).
        # pltpu.roll matches jnp.roll semantics; cross-row / cross-image wrap of
        # the flat rotation is always masked out below, so it is safe.
        s = (-(dy * W + dx)) % L
        return a if s == 0 else pltpu.roll(a, s, 1)

    def im2col(a):
        # a: (C, L) activation, channels on sublanes (C a multiple of 8 for
        # conv1 via wrapper-side padding), N*H*W dense on lanes.
        cols = []
        for dy, dx in _TAPS:
            tap = shift_tap(a, dy, dx)
            m = masks[(dy, dx)]
            cols.append(tap if m is None else jnp.where(m, tap, 0.0))
        return jnp.concatenate(cols, axis=0)            # (9*C, L)

    def bn_relu(acc, g, be):
        # Train-mode BatchNorm2d folded with ReLU.  Two-pass centered variance
        # (numerically robust), all statistics and elementwise math in f32.
        inv_l = 1.0 / L
        mean = jnp.sum(acc, axis=1, keepdims=True) * inv_l           # (Cout, 1)
        cent = acc - mean
        var = jnp.sum(cent * cent, axis=1, keepdims=True) * inv_l    # biased
        scale = g * lax.rsqrt(var + EPS)
        return jnp.maximum(cent * scale + be, 0.0)

    # Channel-major view (C, N*H*W): lane-concat of per-image (C, H*W) tiles.
    x_cm = jnp.concatenate([x_ref[n] for n in range(N)], axis=1)

    mm_dtype = w1_ref.dtype   # f32 or bf16 MXU operands; accumulation is f32.

    # conv1: single im2col matmul, K = 9*Cin_pad.
    acc1 = jnp.dot(w1_ref[...], im2col(x_cm).astype(mm_dtype),
                   preferred_element_type=jnp.float32)
    y1 = bn_relu(acc1, g1_ref[...], be1_ref[...])

    # conv2: same pattern, K = 9*Cout.  y1 stays on-chip (no HBM round-trip).
    acc2 = jnp.dot(w2_ref[...], im2col(y1).astype(mm_dtype),
                   preferred_element_type=jnp.float32)
    y2 = bn_relu(acc2, g2_ref[...], be2_ref[...])

    # Back to (N, Cout, H*W); per-image lane slices are 128-aligned (HW = 256).
    for n in range(N):
        out_ref[n] = y2[:, n * HW:(n + 1) * HW]


def unet_double_conv(x_nchw, params, *, matmul_dtype=jnp.float32):
    """Pallas implementation of UNetDoubleConv.forward. Input/output are NCHW."""
    N, Cin, H, W = x_nchw.shape
    Cout = params["w1"].shape[0]
    HW = H * W
    L = N * HW

    # Pad input channels to the f32 sublane tile (8): whole-vreg taps and a
    # relayout-free axis-0 tap concat.  Zero channels + zero weight columns
    # leave the conv result unchanged.
    Cin_pad = ((Cin + 7) // 8) * 8

    # NCHW is already the layout we want (channels -> sublanes, H*W -> lanes):
    # only free reshapes at the boundary, no transposes, no padded HBM copy.
    x = x_nchw.reshape(N, Cin, HW).astype(jnp.float32)
    if Cin_pad != Cin:
        x = jnp.pad(x, ((0, 0), (0, Cin_pad - Cin), (0, 0)))

    # PyTorch conv weights (Cout, Cin, 3, 3) -> im2col form (Cout, 9*C),
    # column order (ky, kx, ci) to match the kernel's tap stacking.
    w1 = jnp.transpose(params["w1"], (0, 2, 3, 1))            # (Cout, 3, 3, Cin)
    if Cin_pad != Cin:
        w1 = jnp.pad(w1, ((0, 0), (0, 0), (0, 0), (0, Cin_pad - Cin)))
    w1 = w1.reshape(Cout, 9 * Cin_pad).astype(matmul_dtype)
    w2 = jnp.transpose(params["w2"], (0, 2, 3, 1)).reshape(Cout, 9 * Cout)
    w2 = w2.astype(matmul_dtype)
    g1 = params["g1"].reshape(Cout, 1).astype(jnp.float32)
    be1 = params["be1"].reshape(Cout, 1).astype(jnp.float32)
    g2 = params["g2"].reshape(Cout, 1).astype(jnp.float32)
    be2 = params["be2"].reshape(Cout, 1).astype(jnp.float32)
    # NOTE: conv biases b1/b2 are intentionally NOT passed: a per-channel
    # constant added before train-mode BN cancels exactly under the mean
    # subtraction.  Re-add them before ever reusing this with eval-mode BN.

    # Power-of-two H, W -> coordinates/masks built fully in-kernel from iota;
    # otherwise fall back to passing the (1, L) coordinate arrays.
    inline_coords = (H & (H - 1) == 0) and (W & (W - 1) == 0)
    args = [x]
    if not inline_coords:
        f = jnp.arange(L, dtype=jnp.int32)
        args += [((f // W) % H).reshape(1, L), (f % W).reshape(1, L)]
    args += [w1, g1, be1, w2, g2, be2]

    kernel = functools.partial(_double_conv_kernel, N=N, H=H, W=W, Cout=Cout,
                               inline_coords=inline_coords)
    vmem = pl.BlockSpec(memory_space=pltpu.MemorySpace.VMEM)

    # TODO(synk): at production UNet sizes (C >= 128, large H*W) switch to a
    # row-band grid over H (1-row halo, "parallel" band axis for megacore,
    # constant-index weight specs), per-tap accumulating matmuls instead of the
    # 9x im2col materialization, partial-sum BN statistics finalized with
    # pl.when on the last band, and bf16 lane-dense output writeback; re-derive
    # band size / vmem_limit_bytes per generation (v7x: 64 MiB VMEM, 2 TCs).
    out = pl.pallas_call(
        kernel,
        out_shape=jax.ShapeDtypeStruct((N, Cout, HW), jnp.float32),
        in_specs=[vmem] * len(args),
        out_specs=vmem,
        compiler_params=pltpu.CompilerParams(vmem_limit_bytes=32 * 1024 * 1024),
    )(*args)

    return out.reshape(N, Cout, H, W)


def _reference(x_nchw, params):
    """Pure-JAX reference mirroring the PyTorch train-mode forward (incl. biases)."""
    x = jnp.transpose(x_nchw, (0, 2, 3, 1)).astype(jnp.float32)   # NHWC

    def block(x, w, b, g, be):
        w_hwio = jnp.transpose(w, (2, 3, 1, 0))                   # (3,3,Cin,Cout)
        y = lax.conv_general_dilated(
            x, w_hwio, window_strides=(1, 1), padding="SAME",
            dimension_numbers=("NHWC", "HWIO", "NHWC"))
        y = y + b
        mean = jnp.mean(y, axis=(0, 1, 2))
        var = jnp.mean((y - mean) ** 2, axis=(0, 1, 2))           # biased variance
        y = (y - mean) / jnp.sqrt(var + EPS) * g + be
        return jnp.maximum(y, 0.0)

    y = block(x, params["w1"], params["b1"], params["g1"], params["be1"])
    y = block(y, params["w2"], params["b2"], params["g2"], params["be2"])
    return jnp.transpose(y, (0, 3, 1, 2))


def _init_params(key, in_ch, out_ch):
    ks = jax.random.split(key, 8)
    return {
        # PyTorch-style layouts: weight (Cout, Cin, 3, 3), 1-D per-channel vectors.
        "w1": 0.1 * jax.random.normal(ks[0], (out_ch, in_ch, 3, 3), jnp.float32),
        "b1": 0.1 * jax.random.normal(ks[1], (out_ch,), jnp.float32),
        "g1": 1.0 + 0.1 * jax.random.normal(ks[2], (out_ch,), jnp.float32),
        "be1": 0.1 * jax.random.normal(ks[3], (out_ch,), jnp.float32),
        "w2": 0.1 * jax.random.normal(ks[4], (out_ch, out_ch, 3, 3), jnp.float32),
        "b2": 0.1 * jax.random.normal(ks[5], (out_ch,), jnp.float32),
        "g2": 1.0 + 0.1 * jax.random.normal(ks[6], (out_ch,), jnp.float32),
        "be2": 0.1 * jax.random.normal(ks[7], (out_ch,), jnp.float32),
    }


if __name__ == "__main__":
    key = jax.random.PRNGKey(0)
    kx, kp = jax.random.split(key)

    N, in_ch, out_ch, H, W = 2, 4, 8, 16, 16
    x = jax.random.normal(kx, (N, in_ch, H, W), jnp.float32)      # NCHW like PyTorch
    params = _init_params(kp, in_ch, out_ch)

    y_ref = _reference(x, params)

    # f32 MXU operands: tight check against the PyTorch-equivalent reference.
    y = jax.block_until_ready(unet_double_conv(x, params, matmul_dtype=jnp.float32))
    assert y.shape == (N, out_ch, H, W)
    err = float(jnp.max(jnp.abs(y - y_ref)))
    assert jnp.allclose(y, y_ref, rtol=1e-4, atol=1e-4), err

    # bf16 MXU operands (production default on v5e/v6e/v7x): loose smoke check,
    # BN/ReLU math stays f32 so only matmul operand rounding differs.
    y_bf = jax.block_until_ready(unet_double_conv(x, params, matmul_dtype=jnp.bfloat16))
    err_bf = float(jnp.max(jnp.abs(y_bf - y_ref)))
    assert jnp.allclose(y_bf, y_ref, rtol=1e-1, atol=1e-1), err_bf

    print("KERNEL_OK")
</pallas_src>

<mosaic_0001>
module attributes {stable_mosaic.version = 11 : i64} {
  func.func @_double_conv_kernel(%arg0: memref<2x8x256xf32, #tpu.memory_space<vmem>>, %arg1: memref<8x72xf32, #tpu.memory_space<vmem>>, %arg2: memref<8x1xf32, #tpu.memory_space<vmem>>, %arg3: memref<8x1xf32, #tpu.memory_space<vmem>>, %arg4: memref<8x72xf32, #tpu.memory_space<vmem>>, %arg5: memref<8x1xf32, #tpu.memory_space<vmem>>, %arg6: memref<8x1xf32, #tpu.memory_space<vmem>>, %arg7: memref<2x8x256xf32, #tpu.memory_space<vmem>>) attributes {dimension_semantics = [], scalar_prefetch = 0 : i64, scratch_operands = 0 : i64, tpu.core_type = #tpu.core_type<tc>} {
    %0 = tpu.iota {dimensions = array<i32: 1>} : vector<1x512xi32>
    %c15_i32 = arith.constant 15 : i32
    %1 = vector.broadcast %c15_i32 : i32 to vector<1x512xi32>
    %2 = arith.andi %0, %1 : vector<1x512xi32>
    %c4_i32 = arith.constant 4 : i32
    %3 = vector.broadcast %c4_i32 : i32 to vector<1x512xi32>
    %4 = arith.shrsi %0, %3 : vector<1x512xi32>
    %c15_i32_0 = arith.constant 15 : i32
    %5 = vector.broadcast %c15_i32_0 : i32 to vector<1x512xi32>
    %6 = arith.andi %4, %5 : vector<1x512xi32>
    %c1_i32 = arith.constant 1 : i32
    %7 = vector.broadcast %c1_i32 : i32 to vector<1x512xi32>
    %8 = arith.cmpi sge, %6, %7 : vector<1x512xi32>
    %c15_i32_1 = arith.constant 15 : i32
    %9 = vector.broadcast %c15_i32_1 : i32 to vector<1x512xi32>
    %10 = arith.cmpi slt, %6, %9 : vector<1x512xi32>
    %c1_i32_2 = arith.constant 1 : i32
    %11 = vector.broadcast %c1_i32_2 : i32 to vector<1x512xi32>
    %12 = arith.cmpi sge, %2, %11 : vector<1x512xi32>
    %c15_i32_3 = arith.constant 15 : i32
    %13 = vector.broadcast %c15_i32_3 : i32 to vector<1x512xi32>
    %14 = arith.cmpi slt, %2, %13 : vector<1x512xi32>
    %15 = arith.andi %8, %12 : vector<1x512xi1>
    %16 = arith.andi %8, %14 : vector<1x512xi1>
    %17 = arith.andi %10, %12 : vector<1x512xi1>
    %18 = arith.andi %10, %14 : vector<1x512xi1>
    %c0 = arith.constant 0 : index
    %c0_4 = arith.constant 0 : index
    %c0_5 = arith.constant 0 : index
    %19 = vector.load %arg0[%c0, %c0_4, %c0_5] : memref<2x8x256xf32, #tpu.memory_space<vmem>>, vector<1x8x256xf32>
    %20 = vector.shape_cast %19 : vector<1x8x256xf32> to vector<8x256xf32>
    %c1 = arith.constant 1 : index
    %c0_6 = arith.constant 0 : index
    %c0_7 = arith.constant 0 : index
    %21 = vector.load %arg0[%c1, %c0_6, %c0_7] : memref<2x8x256xf32, #tpu.memory_space<vmem>>, vector<1x8x256xf32>
    %22 = vector.shape_cast %21 : vector<1x8x256xf32> to vector<8x256xf32>
    %23 = tpu.concatenate %20, %22 in 1 : vector<8x256xf32>, vector<8x256xf32> -> vector<8x512xf32>
    %c0_8 = arith.constant 0 : index
    %c0_9 = arith.constant 0 : index
    %24 = vector.load %arg1[%c0_8, %c0_9] : memref<8x72xf32, #tpu.memory_space<vmem>>, vector<8x72xf32>
    %c17_i32 = arith.constant 17 : i32
    %25 = tpu.dynamic_rotate %23 by %c17_i32 dim 1 : vector<8x512xf32>, i32 -> vector<8x512xf32>
    %cst = arith.constant 0.000000e+00 : f32
    %26 = vector.shape_cast %15 : vector<1x512xi1> to vector<1x512xi1>
    %27 = vector.broadcast %26 : vector<1x512xi1> to vector<8x512xi1>
    %28 = vector.broadcast %cst : f32 to vector<8x512xf32>
    %29 = arith.select %27, %25, %28 : vector<8x512xi1>, vector<8x512xf32>
    %c16_i32 = arith.constant 16 : i32
    %30 = tpu.dynamic_rotate %23 by %c16_i32 dim 1 : vector<8x512xf32>, i32 -> vector<8x512xf32>
    %cst_10 = arith.constant 0.000000e+00 : f32
    %31 = vector.shape_cast %8 : vector<1x512xi1> to vector<1x512xi1>
    %32 = vector.broadcast %31 : vector<1x512xi1> to vector<8x512xi1>
    %33 = vector.broadcast %cst_10 : f32 to vector<8x512xf32>
    %34 = arith.select %32, %30, %33 : vector<8x512xi1>, vector<8x512xf32>
    %c15_i32_11 = arith.constant 15 : i32
    %35 = tpu.dynamic_rotate %23 by %c15_i32_11 dim 1 : vector<8x512xf32>, i32 -> vector<8x512xf32>
    %cst_12 = arith.constant 0.000000e+00 : f32
    %36 = vector.shape_cast %16 : vector<1x512xi1> to vector<1x512xi1>
    %37 = vector.broadcast %36 : vector<1x512xi1> to vector<8x512xi1>
    %38 = vector.broadcast %cst_12 : f32 to vector<8x512xf32>
    %39 = arith.select %37, %35, %38 : vector<8x512xi1>, vector<8x512xf32>
    %c1_i32_13 = arith.constant 1 : i32
    %40 = tpu.dynamic_rotate %23 by %c1_i32_13 dim 1 : vector<8x512xf32>, i32 -> vector<8x512xf32>
    %cst_14 = arith.constant 0.000000e+00 : f32
    %41 = vector.shape_cast %12 : vector<1x512xi1> to vector<1x512xi1>
    %42 = vector.broadcast %41 : vector<1x512xi1> to vector<8x512xi1>
    %43 = vector.broadcast %cst_14 : f32 to vector<8x512xf32>
    %44 = arith.select %42, %40, %43 : vector<8x512xi1>, vector<8x512xf32>
    %c511_i32 = arith.constant 511 : i32
    %45 = tpu.dynamic_rotate %23 by %c511_i32 dim 1 : vector<8x512xf32>, i32 -> vector<8x512xf32>
    %cst_15 = arith.constant 0.000000e+00 : f32
    %46 = vector.shape_cast %14 : vector<1x512xi1> to vector<1x512xi1>
    %47 = vector.broadcast %46 : vector<1x512xi1> to vector<8x512xi1>
    %48 = vector.broadcast %cst_15 : f32 to vector<8x512xf32>
    %49 = arith.select %47, %45, %48 : vector<8x512xi1>, vector<8x512xf32>
    %c497_i32 = arith.constant 497 : i32
    %50 = tpu.dynamic_rotate %23 by %c497_i32 dim 1 : vector<8x512xf32>, i32 -> vector<8x512xf32>
    %cst_16 = arith.constant 0.000000e+00 : f32
    %51 = vector.shape_cast %17 : vector<1x512xi1> to vector<1x512xi1>
    %52 = vector.broadcast %51 : vector<1x512xi1> to vector<8x512xi1>
    %53 = vector.broadcast %cst_16 : f32 to vector<8x512xf32>
    %54 = arith.select %52, %50, %53 : vector<8x512xi1>, vector<8x512xf32>
    %c496_i32 = arith.constant 496 : i32
    %55 = tpu.dynamic_rotate %23 by %c496_i32 dim 1 : vector<8x512xf32>, i32 -> vector<8x512xf32>
    %cst_17 = arith.constant 0.000000e+00 : f32
    %56 = vector.shape_cast %10 : vector<1x512xi1> to vector<1x512xi1>
    %57 = vector.broadcast %56 : vector<1x512xi1> to vector<8x512xi1>
    %58 = vector.broadcast %cst_17 : f32 to vector<8x512xf32>
    %59 = arith.select %57, %55, %58 : vector<8x512xi1>, vector<8x512xf32>
    %c495_i32 = arith.constant 495 : i32
    %60 = tpu.dynamic_rotate %23 by %c495_i32 dim 1 : vector<8x512xf32>, i32 -> vector<8x512xf32>
    %cst_18 = arith.constant 0.000000e+00 : f32
    %61 = vector.shape_cast %18 : vector<1x512xi1> to vector<1x512xi1>
    %62 = vector.broadcast %61 : vector<1x512xi1> to vector<8x512xi1>
    %63 = vector.broadcast %cst_18 : f32 to vector<8x512xf32>
    %64 = arith.select %62, %60, %63 : vector<8x512xi1>, vector<8x512xf32>
    %65 = tpu.concatenate %29, %34, %39, %44, %23, %49, %54, %59, %64 in 0 : vector<8x512xf32>, vector<8x512xf32>, vector<8x512xf32>, vector<8x512xf32>, vector<8x512xf32>, vector<8x512xf32>, vector<8x512xf32>, vector<8x512xf32>, vector<8x512xf32> -> vector<72x512xf32>
    %cst_19 = arith.constant dense<0.000000e+00> : vector<8x512xf32>
    %66 = tpu.matmul %24, %65, %cst_19 {dimension_numbers = #tpu.dot_dimension_numbers<[1], [0], [0], [1], [0, 0, 1, 1], [], []>} : vector<8x72xf32>, vector<72x512xf32>, vector<8x512xf32> -> vector<8x512xf32>
    %c0_20 = arith.constant 0 : index
    %c0_21 = arith.constant 0 : index
    %67 = vector.load %arg2[%c0_20, %c0_21] : memref<8x1xf32, #tpu.memory_space<vmem>>, vector<8x1xf32>
    %c0_22 = arith.constant 0 : index
    %c0_23 = arith.constant 0 : index
    %68 = vector.load %arg3[%c0_22, %c0_23] : memref<8x1xf32, #tpu.memory_space<vmem>>, vector<8x1xf32>
    %cst_24 = arith.constant dense<0.000000e+00> : vector<8xf32>
    %69 = vector.multi_reduction <add>, %66, %cst_24 [1] : vector<8x512xf32> to vector<8xf32>
    %70 = vector.shape_cast %69 : vector<8xf32> to vector<8x1xf32>
    %cst_25 = arith.constant 0.001953125 : f32
    %71 = vector.broadcast %cst_25 : f32 to vector<8x1xf32>
    %72 = arith.mulf %70, %71 : vector<8x1xf32>
    %73 = vector.broadcast %72 : vector<8x1xf32> to vector<8x512xf32>
    %74 = arith.subf %66, %73 : vector<8x512xf32>
    %75 = arith.mulf %74, %74 : vector<8x512xf32>
    %cst_26 = arith.constant dense<0.000000e+00> : vector<8xf32>
    %76 = vector.multi_reduction <add>, %75, %cst_26 [1] : vector<8x512xf32> to vector<8xf32>
    %77 = vector.shape_cast %76 : vector<8xf32> to vector<8x1xf32>
    %cst_27 = arith.constant 0.001953125 : f32
    %78 = vector.broadcast %cst_27 : f32 to vector<8x1xf32>
    %79 = arith.mulf %77, %78 : vector<8x1xf32>
    %cst_28 = arith.constant 9.99999974E-6 : f32
    %80 = vector.broadcast %cst_28 : f32 to vector<8x1xf32>
    %81 = arith.addf %79, %80 : vector<8x1xf32>
    %82 = math.rsqrt %81 : vector<8x1xf32>
    %83 = arith.mulf %67, %82 : vector<8x1xf32>
    %84 = vector.broadcast %83 : vector<8x1xf32> to vector<8x512xf32>
    %85 = arith.mulf %74, %84 : vector<8x512xf32>
    %86 = vector.broadcast %68 : vector<8x1xf32> to vector<8x512xf32>
    %87 = arith.addf %85, %86 : vector<8x512xf32>
    %cst_29 = arith.constant 0.000000e+00 : f32
    %88 = vector.broadcast %cst_29 : f32 to vector<8x512xf32>
    %89 = arith.maximumf %87, %88 : vector<8x512xf32>
    %c0_30 = arith.constant 0 : index
    %c0_31 = arith.constant 0 : index
    %90 = vector.load %arg4[%c0_30, %c0_31] : memref<8x72xf32, #tpu.memory_space<vmem>>, vector<8x72xf32>
    %c17_i32_32 = arith.constant 17 : i32
    %91 = tpu.dynamic_rotate %89 by %c17_i32_32 dim 1 : vector<8x512xf32>, i32 -> vector<8x512xf32>
    %cst_33 = arith.constant 0.000000e+00 : f32
    %92 = vector.shape_cast %15 : vector<1x512xi1> to vector<1x512xi1>
    %93 = vector.broadcast %92 : vector<1x512xi1> to vector<8x512xi1>
    %94 = vector.broadcast %cst_33 : f32 to vector<8x512xf32>
    %95 = arith.select %93, %91, %94 : vector<8x512xi1>, vector<8x512xf32>
    %c16_i32_34 = arith.constant 16 : i32
    %96 = tpu.dynamic_rotate %89 by %c16_i32_34 dim 1 : vector<8x512xf32>, i32 -> vector<8x512xf32>
    %cst_35 = arith.constant 0.000000e+00 : f32
    %97 = vector.shape_cast %8 : vector<1x512xi1> to vector<1x512xi1>
    %98 = vector.broadcast %97 : vector<1x512xi1> to vector<8x512xi1>
    %99 = vector.broadcast %cst_35 : f32 to vector<8x512xf32>
    %100 = arith.select %98, %96, %99 : vector<8x512xi1>, vector<8x512xf32>
    %c15_i32_36 = arith.constant 15 : i32
    %101 = tpu.dynamic_rotate %89 by %c15_i32_36 dim 1 : vector<8x512xf32>, i32 -> vector<8x512xf32>
    %cst_37 = arith.constant 0.000000e+00 : f32
    %102 = vector.shape_cast %16 : vector<1x512xi1> to vector<1x512xi1>
    %103 = vector.broadcast %102 : vector<1x512xi1> to vector<8x512xi1>
    %104 = vector.broadcast %cst_37 : f32 to vector<8x512xf32>
    %105 = arith.select %103, %101, %104 : vector<8x512xi1>, vector<8x512xf32>
    %c1_i32_38 = arith.constant 1 : i32
    %106 = tpu.dynamic_rotate %89 by %c1_i32_38 dim 1 : vector<8x512xf32>, i32 -> vector<8x512xf32>
    %cst_39 = arith.constant 0.000000e+00 : f32
    %107 = vector.shape_cast %12 : vector<1x512xi1> to vector<1x512xi1>
    %108 = vector.broadcast %107 : vector<1x512xi1> to vector<8x512xi1>
    %109 = vector.broadcast %cst_39 : f32 to vector<8x512xf32>
    %110 = arith.select %108, %106, %109 : vector<8x512xi1>, vector<8x512xf32>
    %c511_i32_40 = arith.constant 511 : i32
    %111 = tpu.dynamic_rotate %89 by %c511_i32_40 dim 1 : vector<8x512xf32>, i32 -> vector<8x512xf32>
    %cst_41 = arith.constant 0.000000e+00 : f32
    %112 = vector.shape_cast %14 : vector<1x512xi1> to vector<1x512xi1>
    %113 = vector.broadcast %112 : vector<1x512xi1> to vector<8x512xi1>
    %114 = vector.broadcast %cst_41 : f32 to vector<8x512xf32>
    %115 = arith.select %113, %111, %114 : vector<8x512xi1>, vector<8x512xf32>
    %c497_i32_42 = arith.constant 497 : i32
    %116 = tpu.dynamic_rotate %89 by %c497_i32_42 dim 1 : vector<8x512xf32>, i32 -> vector<8x512xf32>
    %cst_43 = arith.constant 0.000000e+00 : f32
    %117 = vector.shape_cast %17 : vector<1x512xi1> to vector<1x512xi1>
    %118 = vector.broadcast %117 : vector<1x512xi1> to vector<8x512xi1>
    %119 = vector.broadcast %cst_43 : f32 to vector<8x512xf32>
    %120 = arith.select %118, %116, %119 : vector<8x512xi1>, vector<8x512xf32>
    %c496_i32_44 = arith.constant 496 : i32
    %121 = tpu.dynamic_rotate %89 by %c496_i32_44 dim 1 : vector<8x512xf32>, i32 -> vector<8x512xf32>
    %cst_45 = arith.constant 0.000000e+00 : f32
    %122 = vector.shape_cast %10 : vector<1x512xi1> to vector<1x512xi1>
    %123 = vector.broadcast %122 : vector<1x512xi1> to vector<8x512xi1>
    %124 = vector.broadcast %cst_45 : f32 to vector<8x512xf32>
    %125 = arith.select %123, %121, %124 : vector<8x512xi1>, vector<8x512xf32>
    %c495_i32_46 = arith.constant 495 : i32
    %126 = tpu.dynamic_rotate %89 by %c495_i32_46 dim 1 : vector<8x512xf32>, i32 -> vector<8x512xf32>
    %cst_47 = arith.constant 0.000000e+00 : f32
    %127 = vector.shape_cast %18 : vector<1x512xi1> to vector<1x512xi1>
    %128 = vector.broadcast %127 : vector<1x512xi1> to vector<8x512xi1>
    %129 = vector.broadcast %cst_47 : f32 to vector<8x512xf32>
    %130 = arith.select %128, %126, %129 : vector<8x512xi1>, vector<8x512xf32>
    %131 = tpu.concatenate %95, %100, %105, %110, %89, %115, %120, %125, %130 in 0 : vector<8x512xf32>, vector<8x512xf32>, vector<8x512xf32>, vector<8x512xf32>, vector<8x512xf32>, vector<8x512xf32>, vector<8x512xf32>, vector<8x512xf32>, vector<8x512xf32> -> vector<72x512xf32>
    %cst_48 = arith.constant dense<0.000000e+00> : vector<8x512xf32>
    %132 = tpu.matmul %90, %131, %cst_48 {dimension_numbers = #tpu.dot_dimension_numbers<[1], [0], [0], [1], [0, 0, 1, 1], [], []>} : vector<8x72xf32>, vector<72x512xf32>, vector<8x512xf32> -> vector<8x512xf32>
    %c0_49 = arith.constant 0 : index
    %c0_50 = arith.constant 0 : index
    %133 = vector.load %arg5[%c0_49, %c0_50] : memref<8x1xf32, #tpu.memory_space<vmem>>, vector<8x1xf32>
    %c0_51 = arith.constant 0 : index
    %c0_52 = arith.constant 0 : index
    %134 = vector.load %arg6[%c0_51, %c0_52] : memref<8x1xf32, #tpu.memory_space<vmem>>, vector<8x1xf32>
    %cst_53 = arith.constant dense<0.000000e+00> : vector<8xf32>
    %135 = vector.multi_reduction <add>, %132, %cst_53 [1] : vector<8x512xf32> to vector<8xf32>
    %136 = vector.shape_cast %135 : vector<8xf32> to vector<8x1xf32>
    %cst_54 = arith.constant 0.001953125 : f32
    %137 = vector.broadcast %cst_54 : f32 to vector<8x1xf32>
    %138 = arith.mulf %136, %137 : vector<8x1xf32>
    %139 = vector.broadcast %138 : vector<8x1xf32> to vector<8x512xf32>
    %140 = arith.subf %132, %139 : vector<8x512xf32>
    %141 = arith.mulf %140, %140 : vector<8x512xf32>
    %cst_55 = arith.constant dense<0.000000e+00> : vector<8xf32>
    %142 = vector.multi_reduction <add>, %141, %cst_55 [1] : vector<8x512xf32> to vector<8xf32>
    %143 = vector.shape_cast %142 : vector<8xf32> to vector<8x1xf32>
    %cst_56 = arith.constant 0.001953125 : f32
    %144 = vector.broadcast %cst_56 : f32 to vector<8x1xf32>
    %145 = arith.mulf %143, %144 : vector<8x1xf32>
    %cst_57 = arith.constant 9.99999974E-6 : f32
    %146 = vector.broadcast %cst_57 : f32 to vector<8x1xf32>
    %147 = arith.addf %145, %146 : vector<8x1xf32>
    %148 = math.rsqrt %147 : vector<8x1xf32>
    %149 = arith.mulf %133, %148 : vector<8x1xf32>
    %150 = vector.broadcast %149 : vector<8x1xf32> to vector<8x512xf32>
    %151 = arith.mulf %140, %150 : vector<8x512xf32>
    %152 = vector.broadcast %134 : vector<8x1xf32> to vector<8x512xf32>
    %153 = arith.addf %151, %152 : vector<8x512xf32>
    %cst_58 = arith.constant 0.000000e+00 : f32
    %154 = vector.broadcast %cst_58 : f32 to vector<8x512xf32>
    %155 = arith.maximumf %153, %154 : vector<8x512xf32>
    %156 = vector.extract_strided_slice %155 {offsets = [0, 0], sizes = [8, 256], strides = [1, 1]} : vector<8x512xf32> to vector<8x256xf32>
    %c0_59 = arith.constant 0 : index
    %c0_60 = arith.constant 0 : index
    %c0_61 = arith.constant 0 : index
    %157 = vector.load %arg7[%c0_59, %c0_60, %c0_61] : memref<2x8x256xf32, #tpu.memory_space<vmem>>, vector<1x8x256xf32>
    %158 = vector.shape_cast %157 : vector<1x8x256xf32> to vector<8x256xf32>
    %159 = vector.shape_cast %156 : vector<8x256xf32> to vector<1x8x256xf32>
    tpu.vector_store %arg7[%c0_59, %c0_60, %c0_61], %159 {strides = array<i32>} : memref<2x8x256xf32, #tpu.memory_space<vmem>>, vector<1x8x256xf32>,
    %160 = vector.extract_strided_slice %155 {offsets = [0, 256], sizes = [8, 256], strides = [1, 1]} : vector<8x512xf32> to vector<8x256xf32>
    %c1_62 = arith.constant 1 : index
    %c0_63 = arith.constant 0 : index
    %c0_64 = arith.constant 0 : index
    %161 = vector.load %arg7[%c1_62, %c0_63, %c0_64] : memref<2x8x256xf32, #tpu.memory_space<vmem>>, vector<1x8x256xf32>
    %162 = vector.shape_cast %161 : vector<1x8x256xf32> to vector<8x256xf32>
    %163 = vector.shape_cast %160 : vector<8x256xf32> to vector<1x8x256xf32>
    tpu.vector_store %arg7[%c1_62, %c0_63, %c0_64], %163 {strides = array<i32>} : memref<2x8x256xf32, #tpu.memory_space<vmem>>, vector<1x8x256xf32>,
    return
  }
}

</mosaic_0001>

<llo_original>
// kernel: tpu_custom_call.1
$region0: #{tpu_custom_call.1}
  #allocation0 [shape = 'u32[]', space=smem, size = 0x4, offset = 0x4, fixed_abs, tag = 'smem constant byte address 0x4 - core index']
  #allocation1 [shape = 'u32[72,128]{1,0:T(1,128)}', space=vmem, size = 0x9000, scoped, tag = 'internal scratch']
  %s0 = inlined_call_operand.hbm [shape: f32[2,8,256], index: 0, kind: input, shape index: {}]
  %s1 = inlined_call_operand.vmem [shape: f32[8,72], index: 1, kind: input, shape index: {}]
  %s2 = inlined_call_operand.vmem [shape: f32[8,1], index: 2, kind: input, shape index: {}]
  %s3 = inlined_call_operand.vmem [shape: f32[8,1], index: 3, kind: input, shape index: {}]
  %s4 = inlined_call_operand.vmem [shape: f32[8,72], index: 4, kind: input, shape index: {}]
  %s5 = inlined_call_operand.vmem [shape: f32[8,1], index: 5, kind: input, shape index: {}]
  %s6 = inlined_call_operand.vmem [shape: f32[8,1], index: 6, kind: input, shape index: {}]
  %s7 = inlined_call_operand.hbm [shape: f32[2,8,256], index: 7, kind: output, shape index: {}]
  %s8 = sld [smem:[#allocation0]]
  $region42: #{tpu_custom_call.1} parent=0
    _
  %s10 = ssub.s32 1, %s8
  %s11 = scalar_select 0, %s10, %s8
  $region1: #{tpu_custom_call.1} parent=0
    #allocation2 [shape = 'u8[16384]{0}', space=vmem, size = 0x4000, scoped, tag = 'input window, operand 0, single buffered']
    #allocation3 [shape = 's32[1]{0}', space=sflag, size = 0x4, scoped, tag = 'scoped memory for tpu_custom_call.1']
    #allocation4 [shape = 's32[1]{0}', space=sflag, size = 0x4, scoped, tag = 'scoped memory for tpu_custom_call.1']
    #allocation5 [shape = 'u8[16384]{0}', space=vmem, size = 0x4000, scoped, tag = 'output window, operand 0, single buffered']
    %12 = vsyncpa [#allocation3], 0
    %13 = vsyncpa [#allocation4], 0
    // Predicated region
    $region2: #{tpu_custom_call.1} parent=1 // pred_check
      _
    $region3: #{tpu_custom_call.1} parent=1 // pred_check_branch
      %15 = sbr.rel (0) target = $region5
    $region4: #{tpu_custom_call.1} parent=1 // pred_region
      %17 = vsyncadd [#allocation3], 0
      %s18 = sshll.u32 %s0, 4
      %s19 = int_to_ptr.hbm [resolvable:$true] %s18
      %s20 = sshll.u32 [#allocation2], 4
      %s21 = int_to_ptr.vmem [resolvable:$true] %s20
      %26 = dma.hbm_to_vmem [thread:$0]  %s19, 512, %s21, [#allocation3], 256, 256, 16
    $region5: #{tpu_custom_call.1} parent=1 // pred_fallthru
      _
    // Predicated region
    $region6: #{tpu_custom_call.1} parent=1 // pred_check
      _
    $region7: #{tpu_custom_call.1} parent=1 // pred_check_branch
      %28 = sbr.rel (0) target = $region9
    $region8: #{tpu_custom_call.1} parent=1 // pred_region
      _
    $region9: #{tpu_custom_call.1} parent=1 // pred_fallthru
      _
    // Predicated region
    $region10: #{tpu_custom_call.1} parent=1 // pred_check
      _
    $region11: #{tpu_custom_call.1} parent=1 // pred_check_branch
      %30 = sbr.rel (0) target = $region13
    $region12: #{tpu_custom_call.1} parent=1 // pred_region
      _
    $region13: #{tpu_custom_call.1} parent=1 // pred_fallthru
      _
    // Predicated region
    $region14: #{tpu_custom_call.1} parent=1 // pred_check
      _
    $region15: #{tpu_custom_call.1} parent=1 // pred_check_branch
      %32 = sbr.rel (0) target = $region17
    $region16: #{tpu_custom_call.1} parent=1 // pred_region
      _
    $region17: #{tpu_custom_call.1} parent=1 // pred_fallthru
      _
    // Predicated region
    $region18: #{tpu_custom_call.1} parent=1 // pred_check
      _
    $region19: #{tpu_custom_call.1} parent=1 // pred_check_branch
      %34 = sbr.rel (0) target = $region21
    $region20: #{tpu_custom_call.1} parent=1 // pred_region
      _
    $region21: #{tpu_custom_call.1} parent=1 // pred_fallthru
      _
    // Predicated region
    $region22: #{tpu_custom_call.1} parent=1 // pred_check
      _
    $region23: #{tpu_custom_call.1} parent=1 // pred_check_branch
      %36 = sbr.rel (0) target = $region25
    $region24: #{tpu_custom_call.1} parent=1 // pred_region
      _
    $region25: #{tpu_custom_call.1} parent=1 // pred_fallthru
      _
    // Predicated region
    $region26: #{tpu_custom_call.1} parent=1 // pred_check
      _
    $region27: #{tpu_custom_call.1} parent=1 // pred_check_branch
      %38 = sbr.rel (0) target = $region29
    $region28: #{tpu_custom_call.1} parent=1 // pred_region
      _
    $region29: #{tpu_custom_call.1} parent=1 // pred_fallthru
      _
    // Predicated region
    $region30: #{tpu_custom_call.1} parent=1 // pred_check
      _
    $region31: #{tpu_custom_call.1} parent=1 // pred_check_branch
      %40 = sbr.rel (0) target = $region33
    $region32: #{tpu_custom_call.1} parent=1 // pred_region
      %42 = dma.done [#allocation3], 512
    $region33: #{tpu_custom_call.1} parent=1 // pred_fallthru
      _
    %v43 = vlaneseq
    %v44 = vand.u32 %v43, 127
    %v45 = vadd.s32 %v44, 128
    %v46 = vadd.s32 %v44, 256
    %v47 = vadd.s32 %v44, 384
    %v48 = vand.u32 %v44, 15
    %v49 = vand.u32 %v45, 15
    %v50 = vand.u32 %v46, 15
    %v51 = vand.u32 %v47, 15
    %v52 = vshra.s32 %v44, 4
    %v53 = vshra.s32 %v45, 4
    %v54 = vshra.s32 %v46, 4
    %v55 = vshra.s32 %v47, 4
    %v56 = vand.u32 %v52, 15
    %v57 = vand.u32 %v53, 15
    %v58 = vand.u32 %v54, 15
    %v59 = vand.u32 %v55, 15
    %vm60 = vcmp.ge.s32.totalorder %v56, 1
    %vm61 = vcmp.ge.s32.totalorder %v57, 1
    %vm62 = vcmp.ge.s32.totalorder %v58, 1
    %vm63 = vcmp.ge.s32.totalorder %v59, 1
    %vm64 = vcmp.lt.s32.totalorder %v56, 15
    %vm65 = vcmp.lt.s32.totalorder %v57, 15
    %vm66 = vcmp.lt.s32.totalorder %v58, 15
    %vm67 = vcmp.lt.s32.totalorder %v59, 15
    %vm68 = vcmp.ge.s32.totalorder %v48, 1
    %vm69 = vcmp.ge.s32.totalorder %v49, 1
    %vm70 = vcmp.ge.s32.totalorder %v50, 1
    %vm71 = vcmp.ge.s32.totalorder %v51, 1
    %vm72 = vcmp.lt.s32.totalorder %v48, 15
    %vm73 = vcmp.lt.s32.totalorder %v49, 15
    %vm74 = vcmp.lt.s32.totalorder %v50, 15
    %vm75 = vcmp.lt.s32.totalorder %v51, 15
    %vm76 = vmand %vm60, %vm68
    %vm77 = vmand %vm61, %vm69
    %vm78 = vmand %vm62, %vm70
    %vm79 = vmand %vm63, %vm71
    %vm80 = vmand %vm60, %vm72
    %vm81 = vmand %vm61, %vm73
    %vm82 = vmand %vm62, %vm74
    %vm83 = vmand %vm63, %vm75
    %vm84 = vmand %vm64, %vm68
    %vm85 = vmand %vm65, %vm69
    %vm86 = vmand %vm66, %vm70
    %vm87 = vmand %vm67, %vm71
    %vm88 = vmand %vm64, %vm72
    %vm89 = vmand %vm65, %vm73
    %vm90 = vmand %vm66, %vm74
    %vm91 = vmand %vm67, %vm75
    %v92 = vld [vmem:[#allocation2] sm:$0xff]
    %v93 = vld [vmem:[#allocation2 + $0x8] sm:$0xff]
    %s94 = scalar_lea.vmem [#allocation2], 16
    %v95 = vld [vmem:[%s94] sm:$0xff]
    %v96 = vld [vmem:[%s94 + $0x8] sm:$0xff]
    %v97 = vld [vmem:[%s1] sm:$0xff]
    %98 = vrot.lane.b32.xlu0 %v92, 17
    %v99 = vpop.permute.xlu0 %98
    %100 = vrot.lane.b32.xlu0 %v93, 17
    %v101 = vpop.permute.xlu0 %100
    %102 = vrot.lane.b32.xlu0 %v95, 17
    %v103 = vpop.permute.xlu0 %102
    %104 = vrot.lane.b32.xlu0 %v96, 17
    %v105 = vpop.permute.xlu0 %104
    %vm106 = vcmp.lt.s32.totalorder %v44, 17
    %v107 = vsel %vm106, %v103, %v105
    %v108 = vsel %vm106, %v101, %v103
    %v109 = vsel %vm106, %v99, %v101
    %v110 = vsel %vm106, %v105, %v99
    %v111 = vsel %vm76, 1, 0
    %v112 = vsel %vm77, 1, 0
    %v113 = vsel %vm78, 1, 0
    %v114 = vsel %vm79, 1, 0
    %vm115 = vcmp.eq.s32.totalorder %v111, 1
    %vm116 = vcmp.eq.s32.totalorder %v112, 1
    %vm117 = vcmp.eq.s32.totalorder %v113, 1
    %vm118 = vcmp.eq.s32.totalorder %v114, 1
    %v119 = vsel %vm115, %v110, 0.0
    %v120 = vsel %vm116, %v109, 0.0
    %v121 = vsel %vm117, %v108, 0.0
    %v122 = vsel %vm118, %v107, 0.0
    %123 = vrot.lane.b32.xlu0 %v92, 16
    %v124 = vpop.permute.xlu0 %123
    %125 = vrot.lane.b32.xlu0 %v93, 16
    %v126 = vpop.permute.xlu0 %125
    %127 = vrot.lane.b32.xlu0 %v95, 16
    %v128 = vpop.permute.xlu0 %127
    %129 = vrot.lane.b32.xlu0 %v96, 16
    %v130 = vpop.permute.xlu0 %129
    %vm131 = vcmp.lt.s32.totalorder %v44, 16
    %v132 = vsel %vm131, %v128, %v130
    %v133 = vsel %vm131, %v126, %v128
    %v134 = vsel %vm131, %v124, %v126
    %v135 = vsel %vm131, %v130, %v124
    %v136 = vsel %vm60, 1, 0
    %v137 = vsel %vm61, 1, 0
    %v138 = vsel %vm62, 1, 0
    %v139 = vsel %vm63, 1, 0
    %vm140 = vcmp.eq.s32.totalorder %v136, 1
    %vm141 = vcmp.eq.s32.totalorder %v137, 1
    %vm142 = vcmp.eq.s32.totalorder %v138, 1
    %vm143 = vcmp.eq.s32.totalorder %v139, 1
    %v144 = vsel %vm140, %v135, 0.0
    %v145 = vsel %vm141, %v134, 0.0
    %v146 = vsel %vm142, %v133, 0.0
    %v147 = vsel %vm143, %v132, 0.0
    %148 = vrot.lane.b32.xlu0 %v92, 15
    %v149 = vpop.permute.xlu0 %148
    %150 = vrot.lane.b32.xlu0 %v93, 15
    %v151 = vpop.permute.xlu0 %150
    %152 = vrot.lane.b32.xlu0 %v95, 15
    %v153 = vpop.permute.xlu0 %152
    %154 = vrot.lane.b32.xlu0 %v96, 15
    %v155 = vpop.permute.xlu0 %154
    %vm156 = vcmp.lt.s32.totalorder %v44, 15
    %v157 = vsel %vm156, %v153, %v155
    %v158 = vsel %vm156, %v151, %v153
    %v159 = vsel %vm156, %v149, %v151
    %v160 = vsel %vm156, %v155, %v149
    %v161 = vsel %vm80, 1, 0
    %v162 = vsel %vm81, 1, 0
    %v163 = vsel %vm82, 1, 0
    %v164 = vsel %vm83, 1, 0
    %vm165 = vcmp.eq.s32.totalorder %v161, 1
    %vm166 = vcmp.eq.s32.totalorder %v162, 1
    %vm167 = vcmp.eq.s32.totalorder %v163, 1
    %vm168 = vcmp.eq.s32.totalorder %v164, 1
    %v169 = vsel %vm165, %v160, 0.0
    %v170 = vsel %vm166, %v159, 0.0
    %v171 = vsel %vm167, %v158, 0.0
    %v172 = vsel %vm168, %v157, 0.0
    %173 = vrot.lane.b32.xlu0 %v92, 1
    %v174 = vpop.permute.xlu0 %173
    %175 = vrot.lane.b32.xlu0 %v93, 1
    %v176 = vpop.permute.xlu0 %175
    %177 = vrot.lane.b32.xlu0 %v95, 1
    %v178 = vpop.permute.xlu0 %177
    %179 = vrot.lane.b32.xlu0 %v96, 1
    %v180 = vpop.permute.xlu0 %179
    %vm181 = vcmp.lt.s32.totalorder %v44, 1
    %v182 = vsel %vm181, %v178, %v180
    %v183 = vsel %vm181, %v176, %v178
    %v184 = vsel %vm181, %v174, %v176
    %v185 = vsel %vm181, %v180, %v174
    %v186 = vsel %vm68, 1, 0
    %v187 = vsel %vm69, 1, 0
    %v188 = vsel %vm70, 1, 0
    %v189 = vsel %vm71, 1, 0
    %vm190 = vcmp.eq.s32.totalorder %v186, 1
    %vm191 = vcmp.eq.s32.totalorder %v187, 1
    %vm192 = vcmp.eq.s32.totalorder %v188, 1
    %vm193 = vcmp.eq.s32.totalorder %v189, 1
    %v194 = vsel %vm190, %v185, 0.0
    %v195 = vsel %vm191, %v184, 0.0
    %v196 = vsel %vm192, %v183, 0.0
    %v197 = vsel %vm193, %v182, 0.0
    %198 = vrot.lane.b32.xlu0 %v92, 127
    %v199 = vpop.permute.xlu0 %198
    %200 = vrot.lane.b32.xlu0 %v93, 127
    %v201 = vpop.permute.xlu0 %200
    %202 = vrot.lane.b32.xlu0 %v95, 127
    %v203 = vpop.permute.xlu0 %202
    %204 = vrot.lane.b32.xlu0 %v96, 127
    %v205 = vpop.permute.xlu0 %204
    %vm206 = vcmp.lt.s32.totalorder %v44, 127
    %v207 = vsel %vm206, %v203, %v205
    %v208 = vsel %vm206, %v201, %v203
    %v209 = vsel %vm206, %v199, %v201
    %v210 = vsel %vm206, %v205, %v199
    %v211 = vsel %vm72, 1, 0
    %v212 = vsel %vm73, 1, 0
    %v213 = vsel %vm74, 1, 0
    %v214 = vsel %vm75, 1, 0
    %vm215 = vcmp.eq.s32.totalorder %v211, 1
    %vm216 = vcmp.eq.s32.totalorder %v212, 1
    %vm217 = vcmp.eq.s32.totalorder %v213, 1
    %vm218 = vcmp.eq.s32.totalorder %v214, 1
    %v219 = vsel %vm215, %v209, 0.0
    %v220 = vsel %vm216, %v208, 0.0
    %v221 = vsel %vm217, %v207, 0.0
    %v222 = vsel %vm218, %v210, 0.0
    %223 = vrot.lane.b32.xlu0 %v92, 113
    %v224 = vpop.permute.xlu0 %223
    %225 = vrot.lane.b32.xlu0 %v93, 113
    %v226 = vpop.permute.xlu0 %225
    %227 = vrot.lane.b32.xlu0 %v95, 113
    %v228 = vpop.permute.xlu0 %227
    %229 = vrot.lane.b32.xlu0 %v96, 113
    %v230 = vpop.permute.xlu0 %229
    %vm231 = vcmp.lt.s32.totalorder %v44, 113
    %v232 = vsel %vm231, %v228, %v230
    %v233 = vsel %vm231, %v226, %v228
    %v234 = vsel %vm231, %v224, %v226
    %v235 = vsel %vm231, %v230, %v224
    %v236 = vsel %vm84, 1, 0
    %v237 = vsel %vm85, 1, 0
    %v238 = vsel %vm86, 1, 0
    %v239 = vsel %vm87, 1, 0
    %vm240 = vcmp.eq.s32.totalorder %v236, 1
    %vm241 = vcmp.eq.s32.totalorder %v237, 1
    %vm242 = vcmp.eq.s32.totalorder %v238, 1
    %vm243 = vcmp.eq.s32.totalorder %v239, 1
    %v244 = vsel %vm240, %v234, 0.0
    %v245 = vsel %vm241, %v233, 0.0
    %v246 = vsel %vm242, %v232, 0.0
    %v247 = vsel %vm243, %v235, 0.0
    %248 = vrot.lane.b32.xlu0 %v92, 112
    %v249 = vpop.permute.xlu0 %248
    %250 = vrot.lane.b32.xlu0 %v93, 112
    %v251 = vpop.permute.xlu0 %250
    %252 = vrot.lane.b32.xlu0 %v95, 112
    %v253 = vpop.permute.xlu0 %252
    %254 = vrot.lane.b32.xlu0 %v96, 112
    %v255 = vpop.permute.xlu0 %254
    %vm256 = vcmp.lt.s32.totalorder %v44, 112
    %v257 = vsel %vm256, %v253, %v255
    %v258 = vsel %vm256, %v251, %v253
    %v259 = vsel %vm256, %v249, %v251
    %v260 = vsel %vm256, %v255, %v249
    %v261 = vsel %vm64, 1, 0
    %v262 = vsel %vm65, 1, 0
    %v263 = vsel %vm66, 1, 0
    %v264 = vsel %vm67, 1, 0
    %vm265 = vcmp.eq.s32.totalorder %v261, 1
    %vm266 = vcmp.eq.s32.totalorder %v262, 1
    %vm267 = vcmp.eq.s32.totalorder %v263, 1
    %vm268 = vcmp.eq.s32.totalorder %v264, 1
    %v269 = vsel %vm265, %v259, 0.0
    %v270 = vsel %vm266, %v258, 0.0
    %v271 = vsel %vm267, %v257, 0.0
    %v272 = vsel %vm268, %v260, 0.0
    %273 = vrot.lane.b32.xlu0 %v92, 111
    %v274 = vpop.permute.xlu0 %273
    %275 = vrot.lane.b32.xlu0 %v93, 111
    %v276 = vpop.permute.xlu0 %275
    %277 = vrot.lane.b32.xlu0 %v95, 111
    %v278 = vpop.permute.xlu0 %277
    %279 = vrot.lane.b32.xlu0 %v96, 111
    %v280 = vpop.permute.xlu0 %279
    %vm281 = vcmp.lt.s32.totalorder %v44, 111
    %v282 = vsel %vm281, %v278, %v280
    %v283 = vsel %vm281, %v276, %v278
    %v284 = vsel %vm281, %v274, %v276
    %v285 = vsel %vm281, %v280, %v274
    %v286 = vsel %vm88, 1, 0
    %v287 = vsel %vm89, 1, 0
    %v288 = vsel %vm90, 1, 0
    %v289 = vsel %vm91, 1, 0
    %vm290 = vcmp.eq.s32.totalorder %v286, 1
    %vm291 = vcmp.eq.s32.totalorder %v287, 1
    %vm292 = vcmp.eq.s32.totalorder %v288, 1
    %vm293 = vcmp.eq.s32.totalorder %v289, 1
    %v294 = vsel %vm290, %v284, 0.0
    %v295 = vsel %vm291, %v283, 0.0
    %v296 = vsel %vm292, %v282, 0.0
    %v297 = vsel %vm293, %v285, 0.0
    %vm298 = vcmask 588800
    %v300 = vsel %vm298, %v97, 0
    %302 = vmatpush.msra.mxu0 0.0
    %303 = vmatpush.msra.mxu0 0.0
    %304 = vmatpush.msra.mxu0 0.0
    %305 = vmatpush.msra.mxu0 0.0
    %306 = vmatpush.msra.mxu0 0.0
    %307 = vmatpush.msra.mxu0 0.0
    %308 = vmatpush.msra.mxu0 0.0
    %309 = vmatpush.msra.mxu0 %v294
    %310 = vmatpush.msra.mxu0 %v269
    %311 = vmatpush.msra.mxu0 %v244
    %312 = vmatpush.msra.mxu0 %v219
    %313 = vmatpush.msra.mxu0 %v92
    %314 = vmatpush.msra.mxu0 %v194
    %315 = vmatpush.msra.mxu0 %v169
    %316 = vmatpush.msra.mxu0 %v144
    %317 = vmatpush.msra.mxu0 %v119
    %318 = vmatmul.f32.gmra.mxu0 %v300
    %v319 = vpop.f32.mrf.mxu0
    %v320 = vadd.f32 0.0, %v319
    %321 = vdwg.mxu0
    %322 = vmatpush.msra.mxu0 0.0
    %323 = vmatpush.msra.mxu0 0.0
    %324 = vmatpush.msra.mxu0 0.0
    %325 = vmatpush.msra.mxu0 0.0
    %326 = vmatpush.msra.mxu0 0.0
    %327 = vmatpush.msra.mxu0 0.0
    %328 = vmatpush.msra.mxu0 0.0
    %329 = vmatpush.msra.mxu0 %v295
    %330 = vmatpush.msra.mxu0 %v270
    %331 = vmatpush.msra.mxu0 %v245
    %332 = vmatpush.msra.mxu0 %v220
    %333 = vmatpush.msra.mxu0 %v93
    %334 = vmatpush.msra.mxu0 %v195
    %335 = vmatpush.msra.mxu0 %v170
    %336 = vmatpush.msra.mxu0 %v145
    %337 = vmatpush.msra.mxu0 %v120
    %338 = vmatmul.f32.gmra.mxu0 %v300
    %v339 = vpop.f32.mrf.mxu0
    %v340 = vadd.f32 0.0, %v339
    %341 = vdwg.mxu0
    %342 = vmatpush.msra.mxu0 0.0
    %343 = vmatpush.msra.mxu0 0.0
    %344 = vmatpush.msra.mxu0 0.0
    %345 = vmatpush.msra.mxu0 0.0
    %346 = vmatpush.msra.mxu0 0.0
    %347 = vmatpush.msra.mxu0 0.0
    %348 = vmatpush.msra.mxu0 0.0
    %349 = vmatpush.msra.mxu0 %v296
    %350 = vmatpush.msra.mxu0 %v271
    %351 = vmatpush.msra.mxu0 %v246
    %352 = vmatpush.msra.mxu0 %v221
    %353 = vmatpush.msra.mxu0 %v95
    %354 = vmatpush.msra.mxu0 %v196
    %355 = vmatpush.msra.mxu0 %v171
    %356 = vmatpush.msra.mxu0 %v146
    %357 = vmatpush.msra.mxu0 %v121
    %358 = vmatmul.f32.gmra.mxu0 %v300
    %v359 = vpop.f32.mrf.mxu0
    %v360 = vadd.f32 0.0, %v359
    %361 = vdwg.mxu0
    %362 = vmatpush.msra.mxu0 0.0
    %363 = vmatpush.msra.mxu0 0.0
    %364 = vmatpush.msra.mxu0 0.0
    %365 = vmatpush.msra.mxu0 0.0
    %366 = vmatpush.msra.mxu0 0.0
    %367 = vmatpush.msra.mxu0 0.0
    %368 = vmatpush.msra.mxu0 0.0
    %369 = vmatpush.msra.mxu0 %v297
    %370 = vmatpush.msra.mxu0 %v272
    %371 = vmatpush.msra.mxu0 %v247
    %372 = vmatpush.msra.mxu0 %v222
    %373 = vmatpush.msra.mxu0 %v96
    %374 = vmatpush.msra.mxu0 %v197
    %375 = vmatpush.msra.mxu0 %v172
    %376 = vmatpush.msra.mxu0 %v147
    %377 = vmatpush.msra.mxu0 %v122
    %378 = vmatmul.f32.gmra.mxu0 %v300
    %v379 = vpop.f32.mrf.mxu0
    %v380 = vadd.f32 0.0, %v379
    %381 = vdwg.mxu0
    %v382 = vld [vmem:[%s2] sm:$0xff]
    %v383 = vld [vmem:[%s3] sm:$0xff]
    %v384 = vadd.f32 %v320, %v340
    %v385 = vadd.f32 %v384, %v360
    %v386 = vadd.f32 %v385, %v380
    %387 = vadd.xlane.f32.xlu0 %v386
    %v388 = vpop.xlane.xlu0 %387
    %v389 = vmul.f32 %v388, 0.001953125
    %v390 = vsub.f32 %v320, %v389
    %v391 = vsub.f32 %v340, %v389
    %v392 = vsub.f32 %v360, %v389
    %v393 = vsub.f32 %v380, %v389
    %v394 = vmul.f32 %v390, %v390
    %v395 = vmul.f32 %v391, %v391
    %v396 = vmul.f32 %v392, %v392
    %v397 = vmul.f32 %v393, %v393
    %v398 = vadd.f32 %v394, %v395
    %v399 = vadd.f32 %v398, %v396
    %v400 = vadd.f32 %v399, %v397
    %401 = vadd.xlane.f32.xlu0 %v400
    %v402 = vpop.xlane.xlu0 %401
    %v403 = vmul.f32 %v402, 0.001953125
    %v404 = vadd.f32 %v403, 1e-05
    %v405 = vrsqrt.pop %v404
    %v406 = vmul.f32 %v405, %v404
    %v407 = vmul.f32 %v406, %v405
    %v408 = vmul.f32 0.5, %v407
    %v409 = vsub.f32 1.5, %v408
    %v410 = vmul.f32 %v405, %v409
    %vm411 = vweird.f32 %v404
    %vm412 = vweird.f32 %v405
    %vm413 = vmor %vm411, %vm412
    %v414 = vsel %vm413, %v405, %v410
    %v415 = vmul.f32 %v382, %v414
    %417 = vset.pattern.permute.xlu0 0
    %418 = vperm.xlu0 %417, %v415
    %v419 = vpop.permute.xlu0 %418
    %v421 = vmul.f32 %v390, %v419
    %v422 = vmul.f32 %v391, %v419
    %v423 = vmul.f32 %v392, %v419
    %v424 = vmul.f32 %v393, %v419
    %426 = vset.pattern.permute.xlu0 0
    %427 = vperm.xlu0 %426, %v383
    %v428 = vpop.permute.xlu0 %427
    %v430 = vadd.f32 %v421, %v428
    %v431 = vadd.f32 %v422, %v428
    %v432 = vadd.f32 %v423, %v428
    %v433 = vadd.f32 %v424, %v428
    %v434 = vmax.f32 %v430, 0.0
    %v435 = vmax.f32 %v431, 0.0
    %v436 = vmax.f32 %v432, 0.0
    %v437 = vmax.f32 %v433, 0.0
    %v438 = vld [vmem:[%s4] sm:$0xff]
    %439 = vrot.lane.b32.xlu0 %v434, 17
    %v440 = vpop.permute.xlu0 %439
    %441 = vrot.lane.b32.xlu0 %v435, 17
    %v442 = vpop.permute.xlu0 %441
    %443 = vrot.lane.b32.xlu0 %v436, 17
    %v444 = vpop.permute.xlu0 %443
    %445 = vrot.lane.b32.xlu0 %v437, 17
    %v446 = vpop.permute.xlu0 %445
    %v447 = vsel %vm106, %v444, %v446
    %v448 = vsel %vm106, %v442, %v444
    %v449 = vsel %vm106, %v440, %v442
    %v450 = vsel %vm106, %v446, %v440
    %v451 = vsel %vm115, %v450, 0.0
    %v452 = vsel %vm116, %v449, 0.0
    %v453 = vsel %vm117, %v448, 0.0
    %v454 = vsel %vm118, %v447, 0.0
    %455 = vrot.lane.b32.xlu0 %v434, 16
    %v456 = vpop.permute.xlu0 %455
    %457 = vrot.lane.b32.xlu0 %v435, 16
    %v458 = vpop.permute.xlu0 %457
    %459 = vrot.lane.b32.xlu0 %v436, 16
    %v460 = vpop.permute.xlu0 %459
    %461 = vrot.lane.b32.xlu0 %v437, 16
    %v462 = vpop.permute.xlu0 %461
    %v463 = vsel %vm131, %v460, %v462
    %v464 = vsel %vm131, %v458, %v460
    %v465 = vsel %vm131, %v456, %v458
    %v466 = vsel %vm131, %v462, %v456
    %v467 = vsel %vm140, %v466, 0.0
    %v468 = vsel %vm141, %v465, 0.0
    %v469 = vsel %vm142, %v464, 0.0
    %v470 = vsel %vm143, %v463, 0.0
    %471 = vrot.lane.b32.xlu0 %v434, 15
    %v472 = vpop.permute.xlu0 %471
    %473 = vrot.lane.b32.xlu0 %v435, 15
    %v474 = vpop.permute.xlu0 %473
    %475 = vrot.lane.b32.xlu0 %v436, 15
    %v476 = vpop.permute.xlu0 %475
    %477 = vrot.lane.b32.xlu0 %v437, 15
    %v478 = vpop.permute.xlu0 %477
    %v479 = vsel %vm156, %v476, %v478
    %v480 = vsel %vm156, %v474, %v476
    %v481 = vsel %vm156, %v472, %v474
    %v482 = vsel %vm156, %v478, %v472
    %v483 = vsel %vm165, %v482, 0.0
    %v484 = vsel %vm166, %v481, 0.0
    %v485 = vsel %vm167, %v480, 0.0
    %v486 = vsel %vm168, %v479, 0.0
    %487 = vrot.lane.b32.xlu0 %v434, 1
    %v488 = vpop.permute.xlu0 %487
    %489 = vrot.lane.b32.xlu0 %v435, 1
    %v490 = vpop.permute.xlu0 %489
    %491 = vrot.lane.b32.xlu0 %v436, 1
    %v492 = vpop.permute.xlu0 %491
    %493 = vrot.lane.b32.xlu0 %v437, 1
    %v494 = vpop.permute.xlu0 %493
    %v495 = vsel %vm181, %v492, %v494
    %v496 = vsel %vm181, %v490, %v492
    %v497 = vsel %vm181, %v488, %v490
    %v498 = vsel %vm181, %v494, %v488
    %v499 = vsel %vm190, %v498, 0.0
    %v500 = vsel %vm191, %v497, 0.0
    %v501 = vsel %vm192, %v496, 0.0
    %v502 = vsel %vm193, %v495, 0.0
    %503 = vrot.lane.b32.xlu0 %v434, 127
    %v504 = vpop.permute.xlu0 %503
    %505 = vrot.lane.b32.xlu0 %v435, 127
    %v506 = vpop.permute.xlu0 %505
    %507 = vrot.lane.b32.xlu0 %v436, 127
    %v508 = vpop.permute.xlu0 %507
    %509 = vrot.lane.b32.xlu0 %v437, 127
    %v510 = vpop.permute.xlu0 %509
    %v511 = vsel %vm206, %v508, %v510
    %v512 = vsel %vm206, %v506, %v508
    %v513 = vsel %vm206, %v504, %v506
    %v514 = vsel %vm206, %v510, %v504
    %v515 = vsel %vm215, %v513, 0.0
    %v516 = vsel %vm216, %v512, 0.0
    %v517 = vsel %vm217, %v511, 0.0
    %v518 = vsel %vm218, %v514, 0.0
    %519 = vrot.lane.b32.xlu0 %v434, 113
    %v520 = vpop.permute.xlu0 %519
    %521 = vrot.lane.b32.xlu0 %v435, 113
    %v522 = vpop.permute.xlu0 %521
    %523 = vrot.lane.b32.xlu0 %v436, 113
    %v524 = vpop.permute.xlu0 %523
    %525 = vrot.lane.b32.xlu0 %v437, 113
    %v526 = vpop.permute.xlu0 %525
    %v527 = vsel %vm231, %v524, %v526
    %v528 = vsel %vm231, %v522, %v524
    %v529 = vsel %vm231, %v520, %v522
    %v530 = vsel %vm231, %v526, %v520
    %v531 = vsel %vm240, %v529, 0.0
    %v532 = vsel %vm241, %v528, 0.0
    %v533 = vsel %vm242, %v527, 0.0
    %v534 = vsel %vm243, %v530, 0.0
    %535 = vrot.lane.b32.xlu0 %v434, 112
    %v536 = vpop.permute.xlu0 %535
    %537 = vrot.lane.b32.xlu0 %v435, 112
    %v538 = vpop.permute.xlu0 %537
    %539 = vrot.lane.b32.xlu0 %v436, 112
    %v540 = vpop.permute.xlu0 %539
    %541 = vrot.lane.b32.xlu0 %v437, 112
    %v542 = vpop.permute.xlu0 %541
    %v543 = vsel %vm256, %v540, %v542
    %v544 = vsel %vm256, %v538, %v540
    %v545 = vsel %vm256, %v536, %v538
    %v546 = vsel %vm256, %v542, %v536
    %v547 = vsel %vm265, %v545, 0.0
    %v548 = vsel %vm266, %v544, 0.0
    %v549 = vsel %vm267, %v543, 0.0
    %v550 = vsel %vm268, %v546, 0.0
    %551 = vrot.lane.b32.xlu0 %v434, 111
    %v552 = vpop.permute.xlu0 %551
    %553 = vrot.lane.b32.xlu0 %v435, 111
    %v554 = vpop.permute.xlu0 %553
    %555 = vrot.lane.b32.xlu0 %v436, 111
    %v556 = vpop.permute.xlu0 %555
    %557 = vrot.lane.b32.xlu0 %v437, 111
    %v558 = vpop.permute.xlu0 %557
    %v559 = vsel %vm281, %v556, %v558
    %v560 = vsel %vm281, %v554, %v556
    %v561 = vsel %vm281, %v552, %v554
    %v562 = vsel %vm281, %v558, %v552
    %v563 = vsel %vm290, %v561, 0.0
    %v564 = vsel %vm291, %v560, 0.0
    %v565 = vsel %vm292, %v559, 0.0
    %v566 = vsel %vm293, %v562, 0.0
    %v568 = vsel %vm298, %v438, 0
    %570 = vmatpush.msra.mxu0 0.0
    %571 = vmatpush.msra.mxu0 0.0
    %572 = vmatpush.msra.mxu0 0.0
    %573 = vmatpush.msra.mxu0 0.0
    %574 = vmatpush.msra.mxu0 0.0
    %575 = vmatpush.msra.mxu0 0.0
    %576 = vmatpush.msra.mxu0 0.0
    %577 = vmatpush.msra.mxu0 %v563
    %578 = vmatpush.msra.mxu0 %v547
    %579 = vmatpush.msra.mxu0 %v531
    %580 = vmatpush.msra.mxu0 %v515
    %581 = vmatpush.msra.mxu0 %v434
    %582 = vmatpush.msra.mxu0 %v499
    %583 = vmatpush.msra.mxu0 %v483
    %584 = vmatpush.msra.mxu0 %v467
    %585 = vmatpush.msra.mxu0 %v451
    %586 = vmatmul.f32.gmra.mxu0 %v568
    %v587 = vpop.f32.mrf.mxu0
    %v588 = vadd.f32 0.0, %v587
    %589 = vdwg.mxu0
    %590 = vmatpush.msra.mxu0 0.0
    %591 = vmatpush.msra.mxu0 0.0
    %592 = vmatpush.msra.mxu0 0.0
    %593 = vmatpush.msra.mxu0 0.0
    %594 = vmatpush.msra.mxu0 0.0
    %595 = vmatpush.msra.mxu0 0.0
    %596 = vmatpush.msra.mxu0 0.0
    %597 = vmatpush.msra.mxu0 %v564
    %598 = vmatpush.msra.mxu0 %v548
    %599 = vmatpush.msra.mxu0 %v532
    %600 = vmatpush.msra.mxu0 %v516
    %601 = vmatpush.msra.mxu0 %v435
    %602 = vmatpush.msra.mxu0 %v500
    %603 = vmatpush.msra.mxu0 %v484
    %604 = vmatpush.msra.mxu0 %v468
    %605 = vmatpush.msra.mxu0 %v452
    %606 = vmatmul.f32.gmra.mxu0 %v568
    %v607 = vpop.f32.mrf.mxu0
    %v608 = vadd.f32 0.0, %v607
    %609 = vdwg.mxu0
    %610 = vmatpush.msra.mxu0 0.0
    %611 = vmatpush.msra.mxu0 0.0
    %612 = vmatpush.msra.mxu0 0.0
    %613 = vmatpush.msra.mxu0 0.0
    %614 = vmatpush.msra.mxu0 0.0
    %615 = vmatpush.msra.mxu0 0.0
    %616 = vmatpush.msra.mxu0 0.0
    %617 = vmatpush.msra.mxu0 %v565
    %618 = vmatpush.msra.mxu0 %v549
    %619 = vmatpush.msra.mxu0 %v533
    %620 = vmatpush.msra.mxu0 %v517
    %621 = vmatpush.msra.mxu0 %v436
    %622 = vmatpush.msra.mxu0 %v501
    %623 = vmatpush.msra.mxu0 %v485
    %624 = vmatpush.msra.mxu0 %v469
    %625 = vmatpush.msra.mxu0 %v453
    %626 = vmatmul.f32.gmra.mxu0 %v568
    %v627 = vpop.f32.mrf.mxu0
    %v628 = vadd.f32 0.0, %v627
    %629 = vdwg.mxu0
    %630 = vmatpush.msra.mxu0 0.0
    %631 = vmatpush.msra.mxu0 0.0
    %632 = vmatpush.msra.mxu0 0.0
    %633 = vmatpush.msra.mxu0 0.0
    %634 = vmatpush.msra.mxu0 0.0
    %635 = vmatpush.msra.mxu0 0.0
    %636 = vmatpush.msra.mxu0 0.0
    %637 = vmatpush.msra.mxu0 %v566
    %638 = vmatpush.msra.mxu0 %v550
    %639 = vmatpush.msra.mxu0 %v534
    %640 = vmatpush.msra.mxu0 %v518
    %641 = vmatpush.msra.mxu0 %v437
    %642 = vmatpush.msra.mxu0 %v502
    %643 = vmatpush.msra.mxu0 %v486
    %644 = vmatpush.msra.mxu0 %v470
    %645 = vmatpush.msra.mxu0 %v454
    %646 = vmatmul.f32.gmra.mxu0 %v568
    %v647 = vpop.f32.mrf.mxu0
    %v648 = vadd.f32 0.0, %v647
    %649 = vdwg.mxu0
    %v650 = vld [vmem:[%s5] sm:$0xff]
    %v651 = vld [vmem:[%s6] sm:$0xff]
    %v652 = vadd.f32 %v588, %v608
    %v653 = vadd.f32 %v652, %v628
    %v654 = vadd.f32 %v653, %v648
    %655 = vadd.xlane.f32.xlu0 %v654
    %v656 = vpop.xlane.xlu0 %655
    %v657 = vmul.f32 %v656, 0.001953125
    %v658 = vsub.f32 %v588, %v657
    %v659 = vsub.f32 %v608, %v657
    %v660 = vsub.f32 %v628, %v657
    %v661 = vsub.f32 %v648, %v657
    %v662 = vmul.f32 %v658, %v658
    %v663 = vmul.f32 %v659, %v659
    %v664 = vmul.f32 %v660, %v660
    %v665 = vmul.f32 %v661, %v661
    %v666 = vadd.f32 %v662, %v663
    %v667 = vadd.f32 %v666, %v664
    %v668 = vadd.f32 %v667, %v665
    %669 = vadd.xlane.f32.xlu0 %v668
    %v670 = vpop.xlane.xlu0 %669
    %v671 = vmul.f32 %v670, 0.001953125
    %v672 = vadd.f32 %v671, 1e-05
    %v673 = vrsqrt.pop %v672
    %v674 = vmul.f32 %v673, %v672
    %v675 = vmul.f32 %v674, %v673
    %v676 = vmul.f32 0.5, %v675
    %v677 = vsub.f32 1.5, %v676
    %v678 = vmul.f32 %v673, %v677
    %vm679 = vweird.f32 %v672
    %vm680 = vweird.f32 %v673
    %vm681 = vmor %vm679, %vm680
    %v682 = vsel %vm681, %v673, %v678
    %v683 = vmul.f32 %v650, %v682
    %685 = vset.pattern.permute.xlu0 0
    %686 = vperm.xlu0 %685, %v683
    %v687 = vpop.permute.xlu0 %686
    %v689 = vmul.f32 %v658, %v687
    %v690 = vmul.f32 %v659, %v687
    %v691 = vmul.f32 %v660, %v687
    %v692 = vmul.f32 %v661, %v687
    %694 = vset.pattern.permute.xlu0 0
    %695 = vperm.xlu0 %694, %v651
    %v696 = vpop.permute.xlu0 %695
    %v698 = vadd.f32 %v689, %v696
    %v699 = vadd.f32 %v690, %v696
    %v700 = vadd.f32 %v691, %v696
    %v701 = vadd.f32 %v692, %v696
    %v702 = vmax.f32 %v698, 0.0
    %v703 = vmax.f32 %v699, 0.0
    %v704 = vmax.f32 %v700, 0.0
    %v705 = vmax.f32 %v701, 0.0
    %706 = vst [vmem:[#allocation5] sm:$0xff] %v702
    %707 = vst [vmem:[#allocation5 + $0x8] sm:$0xff] %v703
    %s708 = scalar_lea.vmem [#allocation5], 16
    %709 = vst [vmem:[%s708] sm:$0xff] %v704
    %710 = vst [vmem:[%s708 + $0x8] sm:$0xff] %v705
    // Predicated region
    $region34: #{tpu_custom_call.1} parent=1 // pred_check
      _
    $region35: #{tpu_custom_call.1} parent=1 // pred_check_branch
      %712 = sbr.rel (0) target = $region37
    $region36: #{tpu_custom_call.1} parent=1 // pred_region
      %714 = vsyncadd [#allocation4], 0
      %s715 = sshll.u32 [#allocation5], 4
      %s716 = int_to_ptr.vmem [resolvable:$true] %s715
      %s717 = sshll.u32 %s7, 4
      %s718 = int_to_ptr.hbm [resolvable:$true] %s717
      %723 = dma.vmem_to_hbm [thread:$0]  %s716, 512, %s718, [#allocation4], 256, 256, 16
    $region37: #{tpu_custom_call.1} parent=1 // pred_fallthru
      _
    // Predicated region
    $region38: #{tpu_custom_call.1} parent=1 // pred_check
      _
    $region39: #{tpu_custom_call.1} parent=1 // pred_check_branch
      %725 = sbr.rel (0) target = $region41
    $region40: #{tpu_custom_call.1} parent=1 // pred_region
      %727 = dma.done [#allocation4], 512
    $region41: #{tpu_custom_call.1} parent=1 // pred_fallthru
      _
    %728 = vsyncpa [#allocation3], 1
    %729 = vsyncpa [#allocation4], 1

</llo_original>
